<compile_context>
chip_gen: v7x
topology: tpu7x:2x2x1
jax: 0.10.0
libtpu: 0.0.40
codegen_flags: <defaults>
</compile_context>

<pallas_src>
import functools

import jax
import jax.numpy as jnp
from jax.experimental import pallas as pl
from jax.experimental.pallas import tpu as pltpu


def _gaussian_rbf_kernel(x_ref, off_ref, coeff_ref, o_ref):
    # x_ref:     (1, TL)      lane-dense tile of flattened inputs
    # off_ref:   (n_rbf, 1)   RBF centers (one per sublane row)
    # coeff_ref: (n_rbf, 1)   precomputed -0.5 / width^2
    # o_ref:     (n_rbf, TL)  lane-dense output tile
    x = x_ref[...]                          # (1, TL)
    off = off_ref[...]                      # (n_rbf, 1)
    coeff = coeff_ref[...]                  # (n_rbf, 1)
    diff = x - off                          # (n_rbf, TL) broadcast
    o_ref[...] = jnp.exp(coeff * (diff * diff))


def _round_up(n, m):
    return ((n + m - 1) // m) * m


@functools.partial(jax.jit, static_argnames=("tile_l",))
def gaussian_rbf_pallas(inputs, offsets, widths, *, tile_l=2048):
    """Pallas equivalent of gaussian_rbf(inputs, offsets, widths).

    tile_l: number of lanes (flattened-input elements) per grid step.
            Must be a multiple of 128; swept default 2048 keeps the grid
            multi-step for large M (so v7x's 2 TensorCores both run) while
            each output tile (n_rbf * tile_l * 4 B) stays far under scoped
            VMEM limits on all generations.
    """
    n_rbf = offsets.shape[0]
    orig_shape = inputs.shape

    x_flat = inputs.reshape(-1).astype(jnp.float32)
    m = x_flat.shape[0]

    # Lane-dense tiling of the big M axis (multiples of 128 lanes).
    m128 = _round_up(m, 128)
    tile = min(tile_l, m128)            # tile is a multiple of 128
    m_pad = _round_up(m, tile)          # exact multiple of tile -> no partial tiles
    x_row = jnp.pad(x_flat, (0, m_pad - m)).reshape(1, m_pad)

    off_col = offsets.reshape(n_rbf, 1).astype(jnp.float32)
    # Hoist coeff out of the kernel: keeps the inner loop to sub/mul/mul/exp.
    coeff_col = (-0.5 / (widths.astype(jnp.float32) ** 2)).reshape(n_rbf, 1)

    grid = (m_pad // tile,)

    out = pl.pallas_call(
        _gaussian_rbf_kernel,
        out_shape=jax.ShapeDtypeStruct((n_rbf, m_pad), jnp.float32),
        grid_spec=pltpu.PrefetchScalarGridSpec(
            num_scalar_prefetch=0,
            grid=grid,
            in_specs=[
                pl.BlockSpec((1, tile), lambda i: (0, i)),
                pl.BlockSpec((n_rbf, 1), lambda i: (0, 0)),
                pl.BlockSpec((n_rbf, 1), lambda i: (0, 0)),
            ],
            out_specs=pl.BlockSpec((n_rbf, tile), lambda i: (0, i)),
        ),
        compiler_params=pltpu.CompilerParams(
            dimension_semantics=("parallel",),
        ),
    )(x_row, off_col, coeff_col)

    # (n_rbf, M) -> (M, n_rbf) -> inputs.shape + (n_rbf,)  (layout plumbing)
    return out[:, :m].T.reshape(*orig_shape, n_rbf)


def make_gaussian_rbf_params(n_rbf, cutoff, start=0.0):
    """Deterministic parameter construction, mirroring GaussianRBF.__init__."""
    offsets = jnp.linspace(start, cutoff, n_rbf, dtype=jnp.float32)
    width_val = jnp.abs(offsets[1] - offsets[0])
    widths = width_val * jnp.ones_like(offsets)
    return offsets, widths


def _reference(inputs, offsets, widths):
    coeff = -0.5 / (widths.astype(jnp.float32) ** 2)
    diff = inputs.astype(jnp.float32)[..., None] - offsets.astype(jnp.float32)
    return jnp.exp(coeff * diff * diff).astype(jnp.float32)


if __name__ == "__main__":
    n_rbf = 16
    cutoff = 5.0
    offsets, widths = make_gaussian_rbf_params(n_rbf, cutoff)

    key = jax.random.PRNGKey(0)
    k1, k2 = jax.random.split(key)

    # Case 1: batch of scalar distances, shape (2, 8)
    x1 = jax.random.uniform(k1, (2, 8), dtype=jnp.float32, minval=0.0, maxval=cutoff)
    out1 = jax.block_until_ready(gaussian_rbf_pallas(x1, offsets, widths))
    ref1 = _reference(x1, offsets, widths)
    assert out1.shape == (2, 8, n_rbf)
    assert out1.dtype == jnp.float32
    assert jnp.allclose(out1, ref1, atol=1e-6, rtol=1e-6)

    # Case 2: odd sizes (exercises lane padding + slice-off path)
    x2 = jax.random.uniform(k2, (3, 5, 7), dtype=jnp.float32, minval=0.0, maxval=cutoff)
    out2 = jax.block_until_ready(gaussian_rbf_pallas(x2, offsets, widths))
    ref2 = _reference(x2, offsets, widths)
    assert out2.shape == (3, 5, 7, n_rbf)
    assert out2.dtype == jnp.float32
    assert jnp.allclose(out2, ref2, atol=1e-6, rtol=1e-6)

    print("KERNEL_OK")
</pallas_src>

<mosaic_0001>
module attributes {stable_mosaic.version = 11 : i64} {
  func.func @_gaussian_rbf_kernel(%arg0: i32, %arg1: memref<1x128xf32, #tpu.memory_space<vmem>>, %arg2: memref<16x1xf32, #tpu.memory_space<vmem>>, %arg3: memref<16x1xf32, #tpu.memory_space<vmem>>, %arg4: memref<16x128xf32, #tpu.memory_space<vmem>>) attributes {dimension_semantics = [#tpu.dimension_semantics<parallel>], iteration_bounds = array<i64: 1>, scalar_prefetch = 0 : i64, scratch_operands = 0 : i64, tpu.core_type = #tpu.core_type<tc>, window_params = [{transform_indices = @transform_0, window_bounds = array<i64: 1, 128>}, {pipeline_mode = #tpu.pipeline_mode<synchronous>, transform_indices = @transform_1, window_bounds = array<i64: 16, 1>}, {pipeline_mode = #tpu.pipeline_mode<synchronous>, transform_indices = @transform_2, window_bounds = array<i64: 16, 1>}, {transform_indices = @transform_3, window_bounds = array<i64: 16, 128>}]} {
    %c0 = arith.constant 0 : index
    %c0_0 = arith.constant 0 : index
    %0 = vector.load %arg1[%c0, %c0_0] : memref<1x128xf32, #tpu.memory_space<vmem>>, vector<1x128xf32>
    %c0_1 = arith.constant 0 : index
    %c0_2 = arith.constant 0 : index
    %1 = vector.load %arg2[%c0_1, %c0_2] : memref<16x1xf32, #tpu.memory_space<vmem>>, vector<16x1xf32>
    %c0_3 = arith.constant 0 : index
    %c0_4 = arith.constant 0 : index
    %2 = vector.load %arg3[%c0_3, %c0_4] : memref<16x1xf32, #tpu.memory_space<vmem>>, vector<16x1xf32>
    %3 = vector.broadcast %0 : vector<1x128xf32> to vector<16x128xf32>
    %4 = vector.broadcast %1 : vector<16x1xf32> to vector<16x128xf32>
    %5 = arith.subf %3, %4 : vector<16x128xf32>
    %6 = arith.mulf %5, %5 : vector<16x128xf32>
    %7 = vector.broadcast %2 : vector<16x1xf32> to vector<16x128xf32>
    %8 = arith.mulf %7, %6 : vector<16x128xf32>
    %9 = math.exp %8 : vector<16x128xf32>
    %c0_5 = arith.constant 0 : index
    %c0_6 = arith.constant 0 : index
    %10 = vector.load %arg4[%c0_5, %c0_6] : memref<16x128xf32, #tpu.memory_space<vmem>>, vector<16x128xf32>
    tpu.vector_store %arg4[%c0_5, %c0_6], %9 {strides = array<i32>} : memref<16x128xf32, #tpu.memory_space<vmem>>, vector<16x128xf32>,
    return
  }
  func.func @transform_0(%arg0: i32) -> (i32, i32) {
    %c0_i32 = arith.constant 0 : i32
    %c0_i32_0 = arith.constant 0 : i32
    return %c0_i32, %arg0 : i32, i32
  }
  func.func @transform_1(%arg0: i32) -> (i32, i32) {
    %c0_i32 = arith.constant 0 : i32
    %c0_i32_0 = arith.constant 0 : i32
    %c0_i32_1 = arith.constant 0 : i32
    return %c0_i32, %c0_i32_0 : i32, i32
  }
  func.func @transform_2(%arg0: i32) -> (i32, i32) {
    %c0_i32 = arith.constant 0 : i32
    %c0_i32_0 = arith.constant 0 : i32
    %c0_i32_1 = arith.constant 0 : i32
    return %c0_i32, %c0_i32_0 : i32, i32
  }
  func.func @transform_3(%arg0: i32) -> (i32, i32) {
    %c0_i32 = arith.constant 0 : i32
    %c0_i32_0 = arith.constant 0 : i32
    return %c0_i32, %arg0 : i32, i32
  }
}

</mosaic_0001>

<llo_original>
// kernel: gaussian_rbf_pallas.1
$region0: #{gaussian_rbf_pallas.1}
  #allocation0 [shape = 'u32[]', space=smem, size = 0x4, offset = 0x4, fixed_abs, tag = 'smem constant byte address 0x4 - core index']
  #allocation1 [shape = 'u32[144,128]{1,0:T(1,128)}', space=vmem, size = 0x12000, scoped, tag = 'internal scratch']
  %s0 = inlined_call_operand.vmem [shape: f32[1,128], index: 0, kind: input, shape index: {}]
  %s1 = inlined_call_operand.vmem [shape: f32[16,1], index: 1, kind: input, shape index: {}]
  %s2 = inlined_call_operand.vmem [shape: f32[16,1], index: 2, kind: input, shape index: {}]
  %s3 = inlined_call_operand.vmem [shape: f32[16,128], index: 3, kind: output, shape index: {}]
  %s4 = sld [smem:[#allocation0]]
  $region22: #{gaussian_rbf_pallas.1} parent=0
    _
  %s6 = ssub.s32 1, %s4
  %s7 = scalar_select 0, %s6, %s4
  // Predicated region
  $region2: #{gaussian_rbf_pallas.1} parent=0 // pred_check
    _
  $region3: #{gaussian_rbf_pallas.1} parent=0 // pred_check_branch
    %9 = sbr.rel (0) target = $region5
  $region4: #{gaussian_rbf_pallas.1} parent=0 // pred_region
    _
  $region5: #{gaussian_rbf_pallas.1} parent=0 // pred_fallthru
    _
  // Predicated region
  $region6: #{gaussian_rbf_pallas.1} parent=0 // pred_check
    _
  $region7: #{gaussian_rbf_pallas.1} parent=0 // pred_check_branch
    %11 = sbr.rel (0) target = $region9
  $region8: #{gaussian_rbf_pallas.1} parent=0 // pred_region
    _
  $region9: #{gaussian_rbf_pallas.1} parent=0 // pred_fallthru
    _
  // Predicated region
  $region10: #{gaussian_rbf_pallas.1} parent=0 // pred_check
    _
  $region11: #{gaussian_rbf_pallas.1} parent=0 // pred_check_branch
    %13 = sbr.rel (0) target = $region13
  $region12: #{gaussian_rbf_pallas.1} parent=0 // pred_region
    _
  $region13: #{gaussian_rbf_pallas.1} parent=0 // pred_fallthru
    _
  %v14 = vld [vmem:[%s0] sm:$0x1]
  %v15 = vld [vmem:[%s1] sm:$0xff]
  %v16 = vld [vmem:[%s1 + $0x8] sm:$0xff]
  %v17 = vld [vmem:[%s2] sm:$0xff]
  %v18 = vld [vmem:[%s2 + $0x8] sm:$0xff]
  %v20 = vlaneseq
  %v21 = vshrl.u32 %v20, 7
  %v22 = vsub.s32 0, %v21
  %v23 = vrot.slane %v14, %v22
  %26 = vset.pattern.permute.xlu0 0
  %27 = vperm.xlu0 %26, %v15
  %v28 = vpop.permute.xlu0 %27
  %31 = vset.pattern.permute.xlu0 0
  %32 = vperm.xlu0 %31, %v16
  %v33 = vpop.permute.xlu0 %32
  %v35 = vsub.f32 %v23, %v28
  %v36 = vsub.f32 %v23, %v33
  %v37 = vmul.f32 %v35, %v35
  %v38 = vmul.f32 %v36, %v36
  %40 = vset.pattern.permute.xlu0 0
  %41 = vperm.xlu0 %40, %v17
  %v42 = vpop.permute.xlu0 %41
  %45 = vset.pattern.permute.xlu0 0
  %46 = vperm.xlu0 %45, %v18
  %v47 = vpop.permute.xlu0 %46
  %v49 = vmul.f32 %v42, %v37
  %v50 = vmul.f32 %v47, %v38
  %v51 = vmul.f32 %v49, 1.442695
  %v52 = vpow.pop %v51
  %v53 = vmul.f32 %v50, 1.442695
  %v54 = vpow.pop %v53
  %55 = vst [vmem:[%s3] sm:$0xff] %v52
  %56 = vst [vmem:[%s3 + $0x8] sm:$0xff] %v54
  // Predicated region
  $region14: #{gaussian_rbf_pallas.1} parent=0 // pred_check
    _
  $region15: #{gaussian_rbf_pallas.1} parent=0 // pred_check_branch
    %58 = sbr.rel (0) target = $region17
  $region16: #{gaussian_rbf_pallas.1} parent=0 // pred_region
    _
  $region17: #{gaussian_rbf_pallas.1} parent=0 // pred_fallthru
    _
  // Predicated region
  $region18: #{gaussian_rbf_pallas.1} parent=0 // pred_check
    _
  $region19: #{gaussian_rbf_pallas.1} parent=0 // pred_check_branch
    %60 = sbr.rel (0) target = $region21
  $region20: #{gaussian_rbf_pallas.1} parent=0 // pred_region
    _
  $region21: #{gaussian_rbf_pallas.1} parent=0 // pred_fallthru
    _

</llo_original>
